<compile_context>
chip_gen: v5e
topology: v5e:2x2
jax: 0.10.0
libtpu: 0.0.40
codegen_flags: <defaults>
</compile_context>

<pallas_src>
import math

import jax
import jax.numpy as jnp
from jax.experimental import pallas as pl
from jax.experimental.pallas import tpu as pltpu


def _auto_reweight_kernel(coeff_ref, bias_ref, *refs):
    # coeff_ref : SMEM (n_tensor,) f32 -- 0.5 / params[i]**2 per streamed loss
    # bias_ref  : SMEM (1,)        f32 -- sum_i log1p(p_i^2) + scalar-loss terms
    # refs      : n_tensor VMEM loss tiles (tile_rows, lane) + 1 VMEM f32 out tile
    n = len(refs) - 1
    loss_refs, out_ref = refs[:n], refs[n]
    acc = coeff_ref[0] * loss_refs[0][...].astype(jnp.float32)
    for i in range(1, n):                     # n is tiny & static -> unrolled
        acc = acc + coeff_ref[i] * loss_refs[i][...].astype(jnp.float32)
    out_ref[...] = acc + bias_ref[0]


def _vmem_budgets():
    """Generation-aware (live-tile-bytes budget, vmem_limit_bytes)."""
    vmem_cap = 64 * 1024 * 1024               # conservative fallback (v7x-sized)
    try:
        vmem_cap = int(pltpu.get_tpu_info().vmem_capacity_bytes)
    except Exception:
        pass
    # v5e/v6e (128 MiB): 32 MiB of live tiles, 64 MiB scoped limit.
    # v7x (64 MiB):      ~21 MiB of live tiles, 48 MiB scoped limit.
    live = min(vmem_cap // 3, 32 * 1024 * 1024)
    limit = min((vmem_cap * 3) // 4, 64 * 1024 * 1024)
    return live, limit


def auto_reweight_loss(params, *losses, small_input_threshold=8192):
    """Pallas implementation of AutoReweightLoss.forward."""
    num = params.shape[0]
    assert len(losses) == num, "number of losses must equal number of params"
    params = params.astype(jnp.float32)
    losses = [jnp.asarray(l) for l in losses]          # keep native dtypes

    out_shape = jnp.broadcast_shapes(*[l.shape for l in losses]) if losses else ()

    # ---- scalar hoist (done once, wrapper-side) -----------------------------
    p2 = params * params
    coeff_all = 0.5 / p2                               # (num,)
    bias = jnp.sum(jnp.log1p(p2))                      # scalar

    tensor_idx = [i for i, l in enumerate(losses) if l.size != 1]
    scalar_idx = [i for i, l in enumerate(losses) if l.size == 1]
    for i in scalar_idx:                               # fold scalar losses into bias
        bias = bias + coeff_all[i] * losses[i].astype(jnp.float32).reshape(())

    if not tensor_idx:                                 # nothing to tile
        return jnp.broadcast_to(bias, out_shape)

    tensor_losses = [losses[i] for i in tensor_idx]
    t_shape = jnp.broadcast_shapes(*[l.shape for l in tensor_losses])
    # TODO(synk): mixed non-scalar shapes ((H,1) vs (1,W)) are still
    # materialized here; the common same-shape case passes through untouched.
    tensor_losses = [
        l if l.shape == t_shape else jnp.broadcast_to(l, t_shape)
        for l in tensor_losses
    ]

    n_elems = math.prod(t_shape)

    # ---- small-input bypass: XLA fusion beats kernel launch + min-tile pad --
    if n_elems < small_input_threshold:
        acc = bias
        for i, l in zip(tensor_idx, tensor_losses):
            acc = acc + coeff_all[i] * l.astype(jnp.float32)
        result = jnp.broadcast_to(acc, t_shape)
        if t_shape != out_shape:
            result = jnp.broadcast_to(result, out_shape)
        return result

    # ---- lane-dense layout (no-copy reshape when aligned) -------------------
    lane = 0
    for cand in (2048, 1024, 512, 256, 128):
        if n_elems % cand == 0:
            lane = cand
            break
    if lane:                                           # aligned: pure bitcast reshape
        rows = n_elems // lane
        slabs = [l.reshape(rows, lane) for l in tensor_losses]
        padded = False
    else:                                              # ragged tail: pad once
        lane = 1024
        rows = pl.cdiv(n_elems, lane)
        n_pad = rows * lane

        def to_slab(l):
            flat = l.reshape(-1)
            flat = jnp.concatenate(
                [flat, jnp.zeros((n_pad - n_elems,), flat.dtype)])
            return flat.reshape(rows, lane)

        slabs = [to_slab(l) for l in tensor_losses]
        padded = True

    # ---- generation-aware row tiling -----------------------------------------
    n_streams = len(slabs) + 1                         # inputs + output
    live_budget, vmem_limit = _vmem_budgets()
    bytes_per_row = lane * 4                           # conservative (f32 output)
    max_tile_rows = max(16, live_budget // (n_streams * 2 * bytes_per_row))

    if rows <= 16:
        tile_rows = rows                               # full-extent block (legal)
    else:
        tile_rows = max(16, (min(max_tile_rows, rows) // 16) * 16)
        # Keep >=2 (ideally >=4) grid steps: double-buffers DMA and shards the
        # "parallel" axis across both TensorCores on v7x.
        target_steps = 4 if rows >= 64 else 2
        tile_rows = min(tile_rows,
                        max(16, (rows // target_steps // 16) * 16))
    grid_rows = pl.cdiv(rows, tile_rows)               # partial final block OK

    coeffs = jnp.stack([coeff_all[i] for i in tensor_idx])
    bias_arr = bias.reshape(1)

    def idx_map(i):
        return (i, 0)

    out2d = pl.pallas_call(
        _auto_reweight_kernel,
        out_shape=jax.ShapeDtypeStruct((rows, lane), jnp.float32),
        grid=(grid_rows,),
        in_specs=[pl.BlockSpec(memory_space=pltpu.MemorySpace.SMEM),   # coeffs
                  pl.BlockSpec(memory_space=pltpu.MemorySpace.SMEM)]   # bias
                 + [pl.BlockSpec((tile_rows, lane), idx_map) for _ in slabs],
        out_specs=pl.BlockSpec((tile_rows, lane), idx_map),
        compiler_params=pltpu.CompilerParams(
            dimension_semantics=("parallel",),
            vmem_limit_bytes=vmem_limit),
    )(coeffs, bias_arr, *slabs)

    if padded:
        result = out2d.reshape(-1)[:n_elems].reshape(t_shape)
    else:
        result = out2d.reshape(t_shape)
    if t_shape != out_shape:
        result = jnp.broadcast_to(result, out_shape)
    return result


def _reference(params, *losses):
    """Pure-JAX reference mirroring the PyTorch forward (f32 accumulation)."""
    params = params.astype(jnp.float32)
    loss_sum = 0.0
    for i, loss in enumerate(losses):
        p2 = params[i] ** 2
        loss_sum = loss_sum + 0.5 / p2 * jnp.asarray(loss).astype(jnp.float32) \
            + jnp.log(1.0 + p2)
    return loss_sum


if __name__ == "__main__":
    key = jax.random.PRNGKey(0)
    k1, k2, k3, k4, k5 = jax.random.split(key, 5)

    # --- Case 1: num=2, per-element loss maps, mixed dtype (f32 + bf16) ------
    # Large enough to take the Pallas path; lane-aligned -> zero-copy reshape,
    # multi-step "parallel" grid.
    num = 2
    params = jnp.ones((num,), dtype=jnp.float32)       # nn.Parameter(torch.ones(num))
    H, W = 256, 256
    loss_a = jax.random.uniform(k1, (H, W), dtype=jnp.float32)
    loss_b = jax.random.uniform(k2, (H, W), dtype=jnp.float32).astype(jnp.bfloat16)

    out = jax.block_until_ready(auto_reweight_loss(params, loss_a, loss_b))
    ref = _reference(params, loss_a, loss_b)
    assert out.shape == ref.shape
    assert jnp.allclose(out, ref, atol=1e-4, rtol=1e-4), "case 1 mismatch"

    # --- Case 2: num=3 with a scalar loss; small maps take the JAX bypass ----
    params3 = jnp.array([1.0, 0.8, 1.3], dtype=jnp.float32)
    loss_c = jax.random.uniform(k3, (16, 128), dtype=jnp.float32)
    loss_d = jax.random.uniform(k4, (16, 128), dtype=jnp.float32)
    loss_e = jax.random.uniform(k5, (), dtype=jnp.float32)
    out3 = jax.block_until_ready(auto_reweight_loss(params3, loss_c, loss_d, loss_e))
    ref3 = _reference(params3, loss_c, loss_d, loss_e)
    assert out3.shape == ref3.shape
    assert jnp.allclose(out3, ref3, atol=1e-5, rtol=1e-5), "case 2 mismatch"

    # --- Case 3: ragged (non-128-multiple) size exercises the pad fallback ---
    params2 = jnp.array([1.1, 0.9], dtype=jnp.float32)
    loss_f = jax.random.uniform(k1, (96, 129), dtype=jnp.float32)
    loss_g = jax.random.uniform(k2, (96, 129), dtype=jnp.float32)
    out_r = jax.block_until_ready(auto_reweight_loss(params2, loss_f, loss_g))
    ref_r = _reference(params2, loss_f, loss_g)
    assert out_r.shape == ref_r.shape
    assert jnp.allclose(out_r, ref_r, atol=1e-5, rtol=1e-5), "case 3 mismatch"

    print("KERNEL_OK")
</pallas_src>

<mosaic_0001>
module attributes {stable_mosaic.version = 11 : i64} {
  func.func @_auto_reweight_kernel(%arg0: i32, %arg1: memref<2xf32, #tpu.memory_space<smem>>, %arg2: memref<1xf32, #tpu.memory_space<smem>>, %arg3: memref<16x2048xf32, #tpu.memory_space<vmem>>, %arg4: memref<16x2048xbf16, #tpu.memory_space<vmem>>, %arg5: memref<16x2048xf32, #tpu.memory_space<vmem>>) attributes {dimension_semantics = [#tpu.dimension_semantics<parallel>], iteration_bounds = array<i64: 2>, scalar_prefetch = 0 : i64, scratch_operands = 0 : i64, tpu.core_type = #tpu.core_type<tc>, window_params = [{transform_indices = @transform_0, window_bounds = array<i64: 2>}, {transform_indices = @transform_1, window_bounds = array<i64: 1>}, {transform_indices = @transform_2, window_bounds = array<i64: 16, 2048>}, {transform_indices = @transform_3, window_bounds = array<i64: 16, 2048>}, {transform_indices = @transform_4, window_bounds = array<i64: 16, 2048>}]} {
    %c0 = arith.constant 0 : index
    %0 = memref.load %arg1[%c0] : memref<2xf32, #tpu.memory_space<smem>>
    %c0_0 = arith.constant 0 : index
    %c0_1 = arith.constant 0 : index
    %1 = vector.load %arg3[%c0_0, %c0_1] : memref<16x2048xf32, #tpu.memory_space<vmem>>, vector<16x2048xf32>
    %2 = vector.broadcast %0 : f32 to vector<16x2048xf32>
    %3 = arith.mulf %2, %1 : vector<16x2048xf32>
    %c1 = arith.constant 1 : index
    %4 = memref.load %arg1[%c1] : memref<2xf32, #tpu.memory_space<smem>>
    %c0_2 = arith.constant 0 : index
    %c0_3 = arith.constant 0 : index
    %5 = vector.load %arg4[%c0_2, %c0_3] : memref<16x2048xbf16, #tpu.memory_space<vmem>>, vector<16x2048xbf16>
    %6 = arith.extf %5 : vector<16x2048xbf16> to vector<16x2048xf32>
    %7 = vector.broadcast %4 : f32 to vector<16x2048xf32>
    %8 = arith.mulf %7, %6 : vector<16x2048xf32>
    %9 = arith.addf %3, %8 : vector<16x2048xf32>
    %c0_4 = arith.constant 0 : index
    %10 = memref.load %arg2[%c0_4] : memref<1xf32, #tpu.memory_space<smem>>
    %11 = vector.broadcast %10 : f32 to vector<16x2048xf32>
    %12 = arith.addf %9, %11 : vector<16x2048xf32>
    %c0_5 = arith.constant 0 : index
    %c0_6 = arith.constant 0 : index
    %13 = vector.load %arg5[%c0_5, %c0_6] : memref<16x2048xf32, #tpu.memory_space<vmem>>, vector<16x2048xf32>
    tpu.vector_store %arg5[%c0_5, %c0_6], %12 {strides = array<i32>} : memref<16x2048xf32, #tpu.memory_space<vmem>>, vector<16x2048xf32>,
    return
  }
  func.func @transform_0(%arg0: i32) -> i32 {
    %c0_i32 = arith.constant 0 : i32
    %c0_i32_0 = arith.constant 0 : i32
    return %c0_i32 : i32
  }
  func.func @transform_1(%arg0: i32) -> i32 {
    %c0_i32 = arith.constant 0 : i32
    %c0_i32_0 = arith.constant 0 : i32
    return %c0_i32 : i32
  }
  func.func @transform_2(%arg0: i32) -> (i32, i32) {
    %c0_i32 = arith.constant 0 : i32
    %c0_i32_0 = arith.constant 0 : i32
    return %arg0, %c0_i32 : i32, i32
  }
  func.func @transform_3(%arg0: i32) -> (i32, i32) {
    %c0_i32 = arith.constant 0 : i32
    %c0_i32_0 = arith.constant 0 : i32
    return %arg0, %c0_i32 : i32, i32
  }
  func.func @transform_4(%arg0: i32) -> (i32, i32) {
    %c0_i32 = arith.constant 0 : i32
    %c0_i32_0 = arith.constant 0 : i32
    return %arg0, %c0_i32 : i32, i32
  }
}

</mosaic_0001>

<llo_original>
// kernel: tpu_custom_call.1
$region0: #{tpu_custom_call.1}
  #allocation0 [shape = 'u32[]', space=smem, size = 0x4, offset = 0x4, fixed_abs, tag = 'smem constant byte address 0x4 - core index']
  #allocation1 [shape = 'u32[72,128]{1,0:T(1,128)}', space=vmem, size = 0x9000, scoped, tag = 'internal scratch']
  #allocation2 [shape = 'f32[1]{0:T(128)S(6)}', space=smem, size = 0x200, scoped, tag = 'scoped memory for tpu_custom_call.1']
  %s0 = inlined_call_operand.vmem [shape: f32[2], index: 0, kind: input, shape index: {}]
  %s1 = inlined_call_operand.<no memory space> [shape: f32[1], index: 1, kind: input, shape index: {}]
  %s2 = inlined_call_operand.hbm [shape: f32[32,2048], index: 2, kind: input, shape index: {}]
  %s3 = inlined_call_operand.hbm [shape: bf16[32,2048], index: 3, kind: input, shape index: {}]
  %s4 = inlined_call_operand.hbm [shape: f32[32,2048], index: 4, kind: output, shape index: {}]
  %s5 = sld [smem:[#allocation0]]
  $region61: #{tpu_custom_call.1} parent=0
    _
  %s7 = ssub.s32 1, %s5
  %s8 = scalar_select 0, %s7, %s5
  %9 = sst [smem:[#allocation2]] %s1
  $region1: #{tpu_custom_call.1} parent=0
    #allocation3 [shape = 'u8[512]{0}', space=smem, size = 0x200, scoped, tag = 'input window, operand 0, single buffered']
    #allocation4 [shape = 's32[2]{0}', space=sflag, size = 0x8, scoped, tag = 'scoped memory for tpu_custom_call.1']
    #allocation5 [shape = 's32[2]{0}', space=sflag, size = 0x8, scoped, tag = 'scoped memory for tpu_custom_call.1']
    #allocation6 [shape = 's32[2]{0}', space=sflag, size = 0x8, scoped, tag = 'scoped memory for tpu_custom_call.1']
    #allocation7 [shape = 'u8[262144]{0}', space=vmem, size = 0x40000, scoped, tag = 'input window, operand 2']
    #allocation8 [shape = 'u8[131072]{0}', space=vmem, size = 0x20000, scoped, tag = 'input window, operand 3']
    #allocation9 [shape = 's32[2]{0}', space=sflag, size = 0x8, scoped, tag = 'scoped memory for tpu_custom_call.1']
    #allocation10 [shape = 'u8[262144]{0}', space=vmem, size = 0x40000, scoped, tag = 'output window, operand 0']
    %10 = vsyncpa [#allocation6], 0
    %11 = vsyncpa [#allocation4], 0
    %s12 = scalar_lea.sflag [#allocation4], 1
    %13 = vsyncpa %s12, 0
    %14 = vsyncpa [#allocation9], 0
    %s15 = scalar_lea.sflag [#allocation9], 1
    %16 = vsyncpa %s15, 0
    %17 = vsyncpa [#allocation5], 0
    %s18 = scalar_lea.sflag [#allocation5], 1
    %19 = vsyncpa %s18, 0
    loop: start=0, step=1, limit=4
    $region2: #{tpu_custom_call.1} parent=1 // loop_pre_header
      _
    $region3: #{tpu_custom_call.1} parent=1 // loop_header
      %s21 = sphi 0, %s25
      %p22 = scmp.ge.s32.totalorder %s21, 4
      %s29 = sphi 0, %s29
      %s31 = sphi 0, %s29
      %s32 = sphi 0, %s31
      %s46 = sphi 0, %s32
      %s50 = sphi 0, %s50
      %s52 = sphi 0, %s50
      %s53 = sphi 0, %s52
      %s67 = sphi 0, %s53
      %s73 = sphi 0, %s75
      %s76 = sphi 0, %s73
      %s77 = sphi 0, %s76
      %s93 = sphi 0, %s77
      %s99 = sphi 0, %s101
      %s102 = sphi 0, %s99
      %s103 = sphi 0, %s102
      %s119 = sphi 0, %s103
      %s125 = sphi 0, %s127
      %s128 = sphi 0, %s125
      %s129 = sphi 0, %s128
      %s145 = sphi 0, %s129
    $region4: #{tpu_custom_call.1} parent=1 // loop_header_branch
      %24 = sbr.rel (%p22) target = $region8
    $region5: #{tpu_custom_call.1} parent=1 // loop_body
      %s26 = ssub.s32 %s21, 1
      %s27 = ssub.s32 %s21, 2
      %s28 = sadd.s32 %s21, 1
      %s30 = sadd.s32 %s29, 1
      %p33 = scmp.eq.s32.totalorder %s21, 1
      %p34 = scmp.ne.s32.totalorder %s29, %s31
      %p35 = scmp.eq.s32.totalorder %s21, 0
      %p36 = por %p34, %p35
      %p37 = scmp.ne.s32.totalorder %s29, %s31
      %p38 = scmp.eq.s32.totalorder %s26, 1
      %p39 = por %p37, %p38
      %p40 = scmp.ne.s32.totalorder %s31, %s32
      %p41 = scmp.eq.s32.totalorder %s26, 0
      %p42 = por %p40, %p41
      %p43 = scmp.ne.s32.totalorder %s31, %s32
      %p44 = scmp.eq.s32.totalorder %s27, 1
      %p45 = por %p43, %p44
      %p47 = scmp.ne.s32.totalorder %s32, %s46
      %p48 = scmp.eq.s32.totalorder %s27, 0
      %p49 = por %p47, %p48
      %s51 = sadd.s32 %s50, 1
      %p54 = scmp.eq.s32.totalorder %s21, 1
      %p55 = scmp.ne.s32.totalorder %s50, %s52
      %p56 = scmp.eq.s32.totalorder %s21, 0
      %p57 = por %p55, %p56
      %p58 = scmp.ne.s32.totalorder %s50, %s52
      %p59 = scmp.eq.s32.totalorder %s26, 1
      %p60 = por %p58, %p59
      %p61 = scmp.ne.s32.totalorder %s52, %s53
      %p62 = scmp.eq.s32.totalorder %s26, 0
      %p63 = por %p61, %p62
      %p64 = scmp.ne.s32.totalorder %s52, %s53
      %p65 = scmp.eq.s32.totalorder %s27, 1
      %p66 = por %p64, %p65
      %p68 = scmp.ne.s32.totalorder %s53, %s67
      %p69 = scmp.eq.s32.totalorder %s27, 0
      %p70 = por %p68, %p69
      %s71 = ssub.s32 %s21, %s28
      %p72 = scmp.eq.s32.totalorder %s71, 0
      %s74 = sadd.s32 %s73, 1
      %s75 = scalar_select %p72, %s73, %s74
      %p78 = pneg %p72
      %p79 = scmp.eq.s32.totalorder %s21, 1
      %p80 = por %p78, %p79
      %p81 = scmp.ne.s32.totalorder %s73, %s76
      %p82 = scmp.eq.s32.totalorder %s21, 0
      %p83 = por %p81, %p82
      %p84 = scmp.ne.s32.totalorder %s73, %s76
      %p85 = scmp.eq.s32.totalorder %s26, 1
      %p86 = por %p84, %p85
      %p87 = scmp.ne.s32.totalorder %s76, %s77
      %p88 = scmp.eq.s32.totalorder %s26, 0
      %p89 = por %p87, %p88
      %p90 = scmp.ne.s32.totalorder %s76, %s77
      %p91 = scmp.eq.s32.totalorder %s27, 1
      %p92 = por %p90, %p91
      %p94 = scmp.ne.s32.totalorder %s77, %s93
      %p95 = scmp.eq.s32.totalorder %s27, 0
      %p96 = por %p94, %p95
      %s97 = ssub.s32 %s21, %s28
      %p98 = scmp.eq.s32.totalorder %s97, 0
      %s100 = sadd.s32 %s99, 1
      %s101 = scalar_select %p98, %s99, %s100
      %p104 = pneg %p98
      %p105 = scmp.eq.s32.totalorder %s21, 1
      %p106 = por %p104, %p105
      %p107 = scmp.ne.s32.totalorder %s99, %s102
      %p108 = scmp.eq.s32.totalorder %s21, 0
      %p109 = por %p107, %p108
      %p110 = scmp.ne.s32.totalorder %s99, %s102
      %p111 = scmp.eq.s32.totalorder %s26, 1
      %p112 = por %p110, %p111
      %p113 = scmp.ne.s32.totalorder %s102, %s103
      %p114 = scmp.eq.s32.totalorder %s26, 0
      %p115 = por %p113, %p114
      %p116 = scmp.ne.s32.totalorder %s102, %s103
      %p117 = scmp.eq.s32.totalorder %s27, 1
      %p118 = por %p116, %p117
      %p120 = scmp.ne.s32.totalorder %s103, %s119
      %p121 = scmp.eq.s32.totalorder %s27, 0
      %p122 = por %p120, %p121
      %s123 = ssub.s32 %s21, %s28
      %p124 = scmp.eq.s32.totalorder %s123, 0
      %s126 = sadd.s32 %s125, 1
      %s127 = scalar_select %p124, %s125, %s126
      %p130 = pneg %p124
      %p131 = scmp.eq.s32.totalorder %s21, 1
      %p132 = por %p130, %p131
      %p133 = scmp.ne.s32.totalorder %s125, %s128
      %p134 = scmp.eq.s32.totalorder %s21, 0
      %p135 = por %p133, %p134
      %p136 = scmp.ne.s32.totalorder %s125, %s128
      %p137 = scmp.eq.s32.totalorder %s26, 1
      %p138 = por %p136, %p137
      %p139 = scmp.ne.s32.totalorder %s128, %s129
      %p140 = scmp.eq.s32.totalorder %s26, 0
      %p141 = por %p139, %p140
      %p142 = scmp.ne.s32.totalorder %s128, %s129
      %p143 = scmp.eq.s32.totalorder %s27, 1
      %p144 = por %p142, %p143
      %p146 = scmp.ne.s32.totalorder %s129, %s145
      %p147 = scmp.eq.s32.totalorder %s27, 0
      %p148 = por %p146, %p147
      %p149 = scmp.le.s32.totalorder 1, %s21
      %p150 = scmp.lt.s32.totalorder %s21, 3
      %p151 = pnand %p149, %p150
      %p152 = pneg %p151
      // Predicated region
      $region9: #{tpu_custom_call.1} parent=5 // pred_check
        _
      $region10: #{tpu_custom_call.1} parent=5 // pred_check_branch
        %154 = sbr.rel (%p151) target = $region12
      $region11: #{tpu_custom_call.1} parent=5 // pred_region
        %s155 = ssub.s32 %s21, 1
        // Predicated region
        $region13: #{tpu_custom_call.1} parent=11 // pred_check
          %p156 = pneg %p42
        $region14: #{tpu_custom_call.1} parent=11 // pred_check_branch
          %158 = sbr.rel (%p156) target = $region16
        $region15: #{tpu_custom_call.1} parent=11 // pred_region
          %160 = vsyncadd [#allocation6], 0
          %s162 = sshll.u32 %s0, 4
          %s163 = int_to_ptr.vmem [resolvable:$true] %s162
          %165 = dma.vmem_to_smem %s163, 16, [#allocation3], [#allocation6]
        $region16: #{tpu_custom_call.1} parent=11 // pred_fallthru
          _
        // Predicated region
        $region17: #{tpu_custom_call.1} parent=11 // pred_check
          %p166 = pneg %p63
        $region18: #{tpu_custom_call.1} parent=11 // pred_check_branch
          %168 = sbr.rel (%p166) target = $region20
        $region19: #{tpu_custom_call.1} parent=11 // pred_region
          _
        $region20: #{tpu_custom_call.1} parent=11 // pred_fallthru
          _
      $region12: #{tpu_custom_call.1} parent=5 // pred_fallthru
        _
      %p169 = scmp.lt.s32.totalorder %s21, 2
      // Predicated region
      $region21: #{tpu_custom_call.1} parent=5 // pred_check
        %p170 = pneg %p169
      $region22: #{tpu_custom_call.1} parent=5 // pred_check_branch
        %172 = sbr.rel (%p170) target = $region24
      $region23: #{tpu_custom_call.1} parent=5 // pred_region
        // Predicated region
        $region25: #{tpu_custom_call.1} parent=23 // pred_check
          %p173 = pneg %p83
        $region26: #{tpu_custom_call.1} parent=23 // pred_check_branch
          %175 = sbr.rel (%p173) target = $region28
        $region27: #{tpu_custom_call.1} parent=23 // pred_region
          %s176 = sand.u32 %s73, 1
          %s177 = scalar_lea.sflag [#allocation4], %s176
          %s178 = sand.u32 %s73, 1
          %s179 = smul.addr %s178, 256
          %s180 = scalar_lea.vmem [#allocation7], %s179
          %s181 = smul.u32 2, %s21
          %183 = vsyncadd %s177, 0
          %s184 = smul.addr %s181, 16
          %s185 = smul.addr %s184, 8
          %s186 = scalar_lea.hbm %s2, %s185
          %s187 = sshll.u32 %s186, 4
          %s188 = int_to_ptr.hbm [resolvable:$true] %s187
          %s189 = sshll.u32 %s180, 4
          %s190 = int_to_ptr.vmem [resolvable:$true] %s189
          %195 = dma.hbm_to_vmem [thread:$0]  %s188, 4096, %s190, %s177, 2048, 2048, 128
        $region28: #{tpu_custom_call.1} parent=23 // pred_fallthru
          _
        // Predicated region
        $region29: #{tpu_custom_call.1} parent=23 // pred_check
          %p196 = pneg %p109
        $region30: #{tpu_custom_call.1} parent=23 // pred_check_branch
          %198 = sbr.rel (%p196) target = $region32
        $region31: #{tpu_custom_call.1} parent=23 // pred_region
          %s199 = sand.u32 %s99, 1
          %s200 = scalar_lea.sflag [#allocation9], %s199
          %s201 = sand.u32 %s99, 1
          %s202 = smul.addr %s201, 128
          %s203 = scalar_lea.vmem [#allocation8], %s202
          %s204 = smul.u32 2, %s21
          %206 = vsyncadd %s200, 0
          %s207 = smul.addr %s204, 16
          %s208 = smul.addr %s207, 4
          %s209 = scalar_lea.hbm %s3, %s208
          %s210 = sshll.u32 %s209, 4
          %s211 = int_to_ptr.hbm [resolvable:$true] %s210
          %s212 = sshll.u32 %s203, 4
          %s213 = int_to_ptr.vmem [resolvable:$true] %s212
          %218 = dma.hbm_to_vmem [thread:$0]  %s211, 2048, %s213, %s200, 1024, 1024, 64
        $region32: #{tpu_custom_call.1} parent=23 // pred_fallthru
          _
      $region24: #{tpu_custom_call.1} parent=5 // pred_fallthru
        _
      %p219 = scmp.le.s32.totalorder 1, %s21
      %p220 = scmp.lt.s32.totalorder %s21, 3
      %p221 = pnand %p219, %p220
      %p222 = pneg %p221
      // Predicated region
      $region33: #{tpu_custom_call.1} parent=5 // pred_check
        _
      $region34: #{tpu_custom_call.1} parent=5 // pred_check_branch
        %224 = sbr.rel (%p221) target = $region36
      $region35: #{tpu_custom_call.1} parent=5 // pred_region
        %s225 = ssub.s32 %s21, 1
        // Predicated region
        $region37: #{tpu_custom_call.1} parent=35 // pred_check
          %p226 = pneg %p42
        $region38: #{tpu_custom_call.1} parent=35 // pred_check_branch
          %228 = sbr.rel (%p226) target = $region40
        $region39: #{tpu_custom_call.1} parent=35 // pred_region
          %230 = dma.done [#allocation6], 16
        $region40: #{tpu_custom_call.1} parent=35 // pred_fallthru
          _
        %s231 = sand.u32 %s76, 1
        %s232 = scalar_lea.sflag [#allocation4], %s231
        %s233 = sand.u32 %s76, 1
        %s234 = smul.addr %s233, 256
        %s235 = scalar_lea.vmem [#allocation7], %s234
        // Predicated region
        $region41: #{tpu_custom_call.1} parent=35 // pred_check
          %p236 = pneg %p89
        $region42: #{tpu_custom_call.1} parent=35 // pred_check_branch
          %238 = sbr.rel (%p236) target = $region44
        $region43: #{tpu_custom_call.1} parent=35 // pred_region
          %240 = dma.done %s232, 4096
        $region44: #{tpu_custom_call.1} parent=35 // pred_fallthru
          _
        %s241 = sand.u32 %s102, 1
        %s242 = scalar_lea.sflag [#allocation9], %s241
        %s243 = sand.u32 %s102, 1
        %s244 = smul.addr %s243, 128
        %s245 = scalar_lea.vmem [#allocation8], %s244
        // Predicated region
        $region45: #{tpu_custom_call.1} parent=35 // pred_check
          %p246 = pneg %p115
        $region46: #{tpu_custom_call.1} parent=35 // pred_check_branch
          %248 = sbr.rel (%p246) target = $region48
        $region47: #{tpu_custom_call.1} parent=35 // pred_region
          %250 = dma.done %s242, 2048
        $region48: #{tpu_custom_call.1} parent=35 // pred_fallthru
          _
        %251 = sfence
        %p252 = pneg %p42
        %p253 = pneg %p39
        %p254 = pneg %p63
        %p255 = pneg %p60
        %s256 = sand.u32 %s76, 1
        %s257 = scalar_lea.sflag [#allocation4], %s256
        %s258 = sand.u32 %s76, 1
        %s259 = smul.addr %s258, 256
        %s260 = scalar_lea.vmem [#allocation7], %s259
        %p261 = pneg %p89
        %p262 = pneg %p86
        %s263 = sand.u32 %s102, 1
        %s264 = scalar_lea.sflag [#allocation9], %s263
        %s265 = sand.u32 %s102, 1
        %s266 = smul.addr %s265, 128
        %s267 = scalar_lea.vmem [#allocation8], %s266
        %p268 = pneg %p115
        %p269 = pneg %p112
        %p270 = pneg %p141
        %p271 = pneg %p138
        %s272 = sand.u32 %s128, 1
        %s273 = scalar_lea.sflag [#allocation5], %s272
        %s274 = sand.u32 %s128, 1
        %s275 = smul.addr %s274, 256
        %s276 = scalar_lea.vmem [#allocation10], %s275
        %s277 = smul.u32 2, %s26
        %s278 = smul.u32 2, %s26
        %s279 = smul.u32 2, %s26
        %s280 = sld [smem:[#allocation3]]
        %v281 = vld [vmem:[%s235] sm:$0xff]
        %v282 = vld [vmem:[%s235 + $0x8] sm:$0xff]
        %v283 = vld [vmem:[%s235 + $0x10] sm:$0xff]
        %v284 = vld [vmem:[%s235 + $0x18] sm:$0xff]
        %v285 = vld [vmem:[%s235 + $0x20] sm:$0xff]
        %v286 = vld [vmem:[%s235 + $0x28] sm:$0xff]
        %v287 = vld [vmem:[%s235 + $0x30] sm:$0xff]
        %v288 = vld [vmem:[%s235 + $0x38] sm:$0xff]
        %v289 = vld [vmem:[%s235 + $0x40] sm:$0xff]
        %v290 = vld [vmem:[%s235 + $0x48] sm:$0xff]
        %v291 = vld [vmem:[%s235 + $0x50] sm:$0xff]
        %v292 = vld [vmem:[%s235 + $0x58] sm:$0xff]
        %v293 = vld [vmem:[%s235 + $0x60] sm:$0xff]
        %v294 = vld [vmem:[%s235 + $0x68] sm:$0xff]
        %v295 = vld [vmem:[%s235 + $0x70] sm:$0xff]
        %v296 = vld [vmem:[%s235 + $0x78] sm:$0xff]
        %v297 = vld [vmem:[%s235 + $0x80] sm:$0xff]
        %v298 = vld [vmem:[%s235 + $0x88] sm:$0xff]
        %v299 = vld [vmem:[%s235 + $0x90] sm:$0xff]
        %v300 = vld [vmem:[%s235 + $0x98] sm:$0xff]
        %v301 = vld [vmem:[%s235 + $0xa0] sm:$0xff]
        %v302 = vld [vmem:[%s235 + $0xa8] sm:$0xff]
        %v303 = vld [vmem:[%s235 + $0xb0] sm:$0xff]
        %v304 = vld [vmem:[%s235 + $0xb8] sm:$0xff]
        %v305 = vld [vmem:[%s235 + $0xc0] sm:$0xff]
        %v306 = vld [vmem:[%s235 + $0xc8] sm:$0xff]
        %v307 = vld [vmem:[%s235 + $0xd0] sm:$0xff]
        %v308 = vld [vmem:[%s235 + $0xd8] sm:$0xff]
        %v309 = vld [vmem:[%s235 + $0xe0] sm:$0xff]
        %v310 = vld [vmem:[%s235 + $0xe8] sm:$0xff]
        %v311 = vld [vmem:[%s235 + $0xf0] sm:$0xff]
        %v312 = vld [vmem:[%s235 + $0xf8] sm:$0xff]
        %v313 = vstv %s280
        %v314 = vmul.f32 %v313, %v281
        %v315 = vmul.f32 %v313, %v282
        %v316 = vmul.f32 %v313, %v283
        %v317 = vmul.f32 %v313, %v284
        %v318 = vmul.f32 %v313, %v285
        %v319 = vmul.f32 %v313, %v286
        %v320 = vmul.f32 %v313, %v287
        %v321 = vmul.f32 %v313, %v288
        %v322 = vmul.f32 %v313, %v289
        %v323 = vmul.f32 %v313, %v290
        %v324 = vmul.f32 %v313, %v291
        %v325 = vmul.f32 %v313, %v292
        %v326 = vmul.f32 %v313, %v293
        %v327 = vmul.f32 %v313, %v294
        %v328 = vmul.f32 %v313, %v295
        %v329 = vmul.f32 %v313, %v296
        %v330 = vmul.f32 %v313, %v297
        %v331 = vmul.f32 %v313, %v298
        %v332 = vmul.f32 %v313, %v299
        %v333 = vmul.f32 %v313, %v300
        %v334 = vmul.f32 %v313, %v301
        %v335 = vmul.f32 %v313, %v302
        %v336 = vmul.f32 %v313, %v303
        %v337 = vmul.f32 %v313, %v304
        %v338 = vmul.f32 %v313, %v305
        %v339 = vmul.f32 %v313, %v306
        %v340 = vmul.f32 %v313, %v307
        %v341 = vmul.f32 %v313, %v308
        %v342 = vmul.f32 %v313, %v309
        %v343 = vmul.f32 %v313, %v310
        %v344 = vmul.f32 %v313, %v311
        %v345 = vmul.f32 %v313, %v312
        %s346 = sld [smem:[#allocation3 + $0x1]]
        %v347 = vld [vmem:[%s245] sm:$0xff]
        %v348 = vld [vmem:[%s245 + $0x8] sm:$0xff]
        %v349 = vld [vmem:[%s245 + $0x10] sm:$0xff]
        %v350 = vld [vmem:[%s245 + $0x18] sm:$0xff]
        %v351 = vld [vmem:[%s245 + $0x20] sm:$0xff]
        %v352 = vld [vmem:[%s245 + $0x28] sm:$0xff]
        %v353 = vld [vmem:[%s245 + $0x30] sm:$0xff]
        %v354 = vld [vmem:[%s245 + $0x38] sm:$0xff]
        %v355 = vld [vmem:[%s245 + $0x40] sm:$0xff]
        %v356 = vld [vmem:[%s245 + $0x48] sm:$0xff]
        %v357 = vld [vmem:[%s245 + $0x50] sm:$0xff]
        %v358 = vld [vmem:[%s245 + $0x58] sm:$0xff]
        %v359 = vld [vmem:[%s245 + $0x60] sm:$0xff]
        %v360 = vld [vmem:[%s245 + $0x68] sm:$0xff]
        %v361 = vld [vmem:[%s245 + $0x70] sm:$0xff]
        %v362 = vld [vmem:[%s245 + $0x78] sm:$0xff]
        %v363 = vunpack.c.l.bf16 %v347
        %v364 = vunpack.c.h.bf16 %v347
        %v365 = vunpack.c.l.bf16 %v348
        %v366 = vunpack.c.h.bf16 %v348
        %v367 = vunpack.c.l.bf16 %v349
        %v368 = vunpack.c.h.bf16 %v349
        %v369 = vunpack.c.l.bf16 %v350
        %v370 = vunpack.c.h.bf16 %v350
        %v371 = vunpack.c.l.bf16 %v351
        %v372 = vunpack.c.h.bf16 %v351
        %v373 = vunpack.c.l.bf16 %v352
        %v374 = vunpack.c.h.bf16 %v352
        %v375 = vunpack.c.l.bf16 %v353
        %v376 = vunpack.c.h.bf16 %v353
        %v377 = vunpack.c.l.bf16 %v354
        %v378 = vunpack.c.h.bf16 %v354
        %v379 = vunpack.c.l.bf16 %v355
        %v380 = vunpack.c.h.bf16 %v355
        %v381 = vunpack.c.l.bf16 %v356
        %v382 = vunpack.c.h.bf16 %v356
        %v383 = vunpack.c.l.bf16 %v357
        %v384 = vunpack.c.h.bf16 %v357
        %v385 = vunpack.c.l.bf16 %v358
        %v386 = vunpack.c.h.bf16 %v358
        %v387 = vunpack.c.l.bf16 %v359
        %v388 = vunpack.c.h.bf16 %v359
        %v389 = vunpack.c.l.bf16 %v360
        %v390 = vunpack.c.h.bf16 %v360
        %v391 = vunpack.c.l.bf16 %v361
        %v392 = vunpack.c.h.bf16 %v361
        %v393 = vunpack.c.l.bf16 %v362
        %v394 = vunpack.c.h.bf16 %v362
        %v395 = vstv %s346
        %v396 = vmul.f32 %v395, %v363
        %v397 = vmul.f32 %v395, %v364
        %v398 = vmul.f32 %v395, %v365
        %v399 = vmul.f32 %v395, %v366
        %v400 = vmul.f32 %v395, %v367
        %v401 = vmul.f32 %v395, %v368
        %v402 = vmul.f32 %v395, %v369
        %v403 = vmul.f32 %v395, %v370
        %v404 = vmul.f32 %v395, %v371
        %v405 = vmul.f32 %v395, %v372
        %v406 = vmul.f32 %v395, %v373
        %v407 = vmul.f32 %v395, %v374
        %v408 = vmul.f32 %v395, %v375
        %v409 = vmul.f32 %v395, %v376
        %v410 = vmul.f32 %v395, %v377
        %v411 = vmul.f32 %v395, %v378
        %v412 = vmul.f32 %v395, %v379
        %v413 = vmul.f32 %v395, %v380
        %v414 = vmul.f32 %v395, %v381
        %v415 = vmul.f32 %v395, %v382
        %v416 = vmul.f32 %v395, %v383
        %v417 = vmul.f32 %v395, %v384
        %v418 = vmul.f32 %v395, %v385
        %v419 = vmul.f32 %v395, %v386
        %v420 = vmul.f32 %v395, %v387
        %v421 = vmul.f32 %v395, %v388
        %v422 = vmul.f32 %v395, %v389
        %v423 = vmul.f32 %v395, %v390
        %v424 = vmul.f32 %v395, %v391
        %v425 = vmul.f32 %v395, %v392
        %v426 = vmul.f32 %v395, %v393
        %v427 = vmul.f32 %v395, %v394
        %v428 = vadd.f32 %v314, %v396
        %v429 = vadd.f32 %v315, %v397
        %v430 = vadd.f32 %v316, %v398
        %v431 = vadd.f32 %v317, %v399
        %v432 = vadd.f32 %v318, %v400
        %v433 = vadd.f32 %v319, %v401
        %v434 = vadd.f32 %v320, %v402
        %v435 = vadd.f32 %v321, %v403
        %v436 = vadd.f32 %v322, %v404
        %v437 = vadd.f32 %v323, %v405
        %v438 = vadd.f32 %v324, %v406
        %v439 = vadd.f32 %v325, %v407
        %v440 = vadd.f32 %v326, %v408
        %v441 = vadd.f32 %v327, %v409
        %v442 = vadd.f32 %v328, %v410
        %v443 = vadd.f32 %v329, %v411
        %v444 = vadd.f32 %v330, %v412
        %v445 = vadd.f32 %v331, %v413
        %v446 = vadd.f32 %v332, %v414
        %v447 = vadd.f32 %v333, %v415
        %v448 = vadd.f32 %v334, %v416
        %v449 = vadd.f32 %v335, %v417
        %v450 = vadd.f32 %v336, %v418
        %v451 = vadd.f32 %v337, %v419
        %v452 = vadd.f32 %v338, %v420
        %v453 = vadd.f32 %v339, %v421
        %v454 = vadd.f32 %v340, %v422
        %v455 = vadd.f32 %v341, %v423
        %v456 = vadd.f32 %v342, %v424
        %v457 = vadd.f32 %v343, %v425
        %v458 = vadd.f32 %v344, %v426
        %v459 = vadd.f32 %v345, %v427
        %s460 = sld [smem:[#allocation2]]
        %v461 = vstv %s460
        %v462 = vadd.f32 %v428, %v461
        %v463 = vadd.f32 %v429, %v461
        %v464 = vadd.f32 %v430, %v461
        %v465 = vadd.f32 %v431, %v461
        %v466 = vadd.f32 %v432, %v461
        %v467 = vadd.f32 %v433, %v461
        %v468 = vadd.f32 %v434, %v461
        %v469 = vadd.f32 %v435, %v461
        %v470 = vadd.f32 %v436, %v461
        %v471 = vadd.f32 %v437, %v461
        %v472 = vadd.f32 %v438, %v461
        %v473 = vadd.f32 %v439, %v461
        %v474 = vadd.f32 %v440, %v461
        %v475 = vadd.f32 %v441, %v461
        %v476 = vadd.f32 %v442, %v461
        %v477 = vadd.f32 %v443, %v461
        %v478 = vadd.f32 %v444, %v461
        %v479 = vadd.f32 %v445, %v461
        %v480 = vadd.f32 %v446, %v461
        %v481 = vadd.f32 %v447, %v461
        %v482 = vadd.f32 %v448, %v461
        %v483 = vadd.f32 %v449, %v461
        %v484 = vadd.f32 %v450, %v461
        %v485 = vadd.f32 %v451, %v461
        %v486 = vadd.f32 %v452, %v461
        %v487 = vadd.f32 %v453, %v461
        %v488 = vadd.f32 %v454, %v461
        %v489 = vadd.f32 %v455, %v461
        %v490 = vadd.f32 %v456, %v461
        %v491 = vadd.f32 %v457, %v461
        %v492 = vadd.f32 %v458, %v461
        %v493 = vadd.f32 %v459, %v461
        %494 = vst [vmem:[%s276] sm:$0xff] %v462
        %495 = vst [vmem:[%s276 + $0x8] sm:$0xff] %v463
        %496 = vst [vmem:[%s276 + $0x10] sm:$0xff] %v464
        %497 = vst [vmem:[%s276 + $0x18] sm:$0xff] %v465
        %498 = vst [vmem:[%s276 + $0x20] sm:$0xff] %v466
        %499 = vst [vmem:[%s276 + $0x28] sm:$0xff] %v467
        %500 = vst [vmem:[%s276 + $0x30] sm:$0xff] %v468
        %501 = vst [vmem:[%s276 + $0x38] sm:$0xff] %v469
        %502 = vst [vmem:[%s276 + $0x40] sm:$0xff] %v470
        %503 = vst [vmem:[%s276 + $0x48] sm:$0xff] %v471
        %504 = vst [vmem:[%s276 + $0x50] sm:$0xff] %v472
        %505 = vst [vmem:[%s276 + $0x58] sm:$0xff] %v473
        %506 = vst [vmem:[%s276 + $0x60] sm:$0xff] %v474
        %507 = vst [vmem:[%s276 + $0x68] sm:$0xff] %v475
        %508 = vst [vmem:[%s276 + $0x70] sm:$0xff] %v476
        %509 = vst [vmem:[%s276 + $0x78] sm:$0xff] %v477
        %510 = vst [vmem:[%s276 + $0x80] sm:$0xff] %v478
        %511 = vst [vmem:[%s276 + $0x88] sm:$0xff] %v479
        %512 = vst [vmem:[%s276 + $0x90] sm:$0xff] %v480
        %513 = vst [vmem:[%s276 + $0x98] sm:$0xff] %v481
        %514 = vst [vmem:[%s276 + $0xa0] sm:$0xff] %v482
        %515 = vst [vmem:[%s276 + $0xa8] sm:$0xff] %v483
        %516 = vst [vmem:[%s276 + $0xb0] sm:$0xff] %v484
        %517 = vst [vmem:[%s276 + $0xb8] sm:$0xff] %v485
        %518 = vst [vmem:[%s276 + $0xc0] sm:$0xff] %v486
        %519 = vst [vmem:[%s276 + $0xc8] sm:$0xff] %v487
        %520 = vst [vmem:[%s276 + $0xd0] sm:$0xff] %v488
        %521 = vst [vmem:[%s276 + $0xd8] sm:$0xff] %v489
        %522 = vst [vmem:[%s276 + $0xe0] sm:$0xff] %v490
        %523 = vst [vmem:[%s276 + $0xe8] sm:$0xff] %v491
        %524 = vst [vmem:[%s276 + $0xf0] sm:$0xff] %v492
        %525 = vst [vmem:[%s276 + $0xf8] sm:$0xff] %v493
        %s526 = sand.u32 %s128, 1
        %s527 = scalar_lea.sflag [#allocation5], %s526
        %s528 = sand.u32 %s128, 1
        %s529 = smul.addr %s528, 256
        %s530 = scalar_lea.vmem [#allocation10], %s529
        // Predicated region
        $region49: #{tpu_custom_call.1} parent=35 // pred_check
          %p531 = pneg %p138
        $region50: #{tpu_custom_call.1} parent=35 // pred_check_branch
          %533 = sbr.rel (%p531) target = $region52
        $region51: #{tpu_custom_call.1} parent=35 // pred_region
          %s534 = smul.u32 2, %s26
          %536 = vsyncadd %s527, 0
          %s537 = smul.addr %s534, 16
          %s538 = smul.addr %s537, 8
          %s539 = scalar_lea.hbm %s4, %s538
          %s540 = sshll.u32 %s530, 4
          %s541 = int_to_ptr.vmem [resolvable:$true] %s540
          %s542 = sshll.u32 %s539, 4
          %s543 = int_to_ptr.hbm [resolvable:$true] %s542
          %548 = dma.vmem_to_hbm [thread:$0]  %s541, 4096, %s543, %s527, 2048, 2048, 128
        $region52: #{tpu_custom_call.1} parent=35 // pred_fallthru
          _
      $region36: #{tpu_custom_call.1} parent=5 // pred_fallthru
        _
      %p549 = scmp.le.s32.totalorder 2, %s21
      // Predicated region
      $region53: #{tpu_custom_call.1} parent=5 // pred_check
        %p550 = pneg %p549
      $region54: #{tpu_custom_call.1} parent=5 // pred_check_branch
        %552 = sbr.rel (%p550) target = $region56
      $region55: #{tpu_custom_call.1} parent=5 // pred_region
        %s553 = ssub.s32 %s21, 2
        // Predicated region
        $region57: #{tpu_custom_call.1} parent=55 // pred_check
          %p554 = pneg %p144
        $region58: #{tpu_custom_call.1} parent=55 // pred_check_branch
          %556 = sbr.rel (%p554) target = $region60
        $region59: #{tpu_custom_call.1} parent=55 // pred_region
          %s557 = sand.u32 %s129, 1
          %s558 = scalar_lea.sflag [#allocation5], %s557
          %s559 = sand.u32 %s129, 1
          %s560 = smul.addr %s559, 256
          %s561 = scalar_lea.vmem [#allocation10], %s560
          %563 = dma.done %s558, 4096
        $region60: #{tpu_custom_call.1} parent=55 // pred_fallthru
          _
      $region56: #{tpu_custom_call.1} parent=5 // pred_fallthru
        _
    $region6: #{tpu_custom_call.1} parent=1 // loop_footer
      %s25 = sadd.s32 1, %s21
    $region7: #{tpu_custom_call.1} parent=1 // loop_footer_branch
      %20 = sbr.rel target = $region3
    $region8: #{tpu_custom_call.1} parent=1 // loop_exit
      _
    %564 = vsyncpa [#allocation4], 1
    %s565 = scalar_lea.sflag [#allocation4], 1
    %566 = vsyncpa %s565, 1
    %567 = vsyncpa [#allocation9], 1
    %s568 = scalar_lea.sflag [#allocation9], 1
    %569 = vsyncpa %s568, 1
    %570 = vsyncpa [#allocation5], 1
    %s571 = scalar_lea.sflag [#allocation5], 1
    %572 = vsyncpa %s571, 1
    %573 = vsyncpa [#allocation6], 1
    %s574 = scalar_lea.sflag [#allocation6], 1
    %575 = vsyncpa %s574, 1

</llo_original>
